<compile_context>
chip_gen: v6e
topology: v6e:2x2x1
jax: 0.10.0
libtpu: 0.0.40
codegen_flags: <defaults>
</compile_context>

<pallas_src>
import functools
import math

import jax
import jax.numpy as jnp
from jax.experimental import pallas as pl
from jax.experimental.pallas import tpu as pltpu


_TARGET_BLOCK_BYTES = 2 * 1024 * 1024   # ~2 MiB input block -> near HBM roofline
_MIN_BLOCK_BYTES = 1 * 1024 * 1024      # never shrink below ~1 MiB for depth
_VMEM_BUDGET_BYTES = 12 * 1024 * 1024   # 2x(in+out) double-buffered blocks, v5e-safe
_MIN_GRID_STEPS = 8                     # pipeline depth / v7x two-TC sharding


def _sublane_multiple(dtype) -> int:
    # f32 -> 8, bf16/f16 -> 16, int8/fp8 -> 32 (sub-32-bit packs along sublanes).
    return max(8, 32 // jnp.dtype(dtype).itemsize)


def _choose_row_tile(n_rows, h, in_itemsize, out_itemsize, sublane, max_rows=None):
    """Pick rows-per-block: ~2 MiB input blocks, VMEM-budgeted, sublane-aligned."""
    row_in_bytes = max(1, h * in_itemsize)
    row_buf_bytes = max(1, 2 * h * (in_itemsize + out_itemsize))  # double-buffered in+out

    tn = max(1, _TARGET_BLOCK_BYTES // row_in_bytes)              # bandwidth target
    tn = min(tn, max(1, _VMEM_BUDGET_BYTES // row_buf_bytes))     # VMEM cap

    # Prefer >= _MIN_GRID_STEPS grid steps, but only if blocks stay >= ~1 MiB.
    rows_for_depth = -(-n_rows // _MIN_GRID_STEPS)
    floor_rows = max(1, _MIN_BLOCK_BYTES // row_in_bytes)
    if rows_for_depth >= floor_rows:
        tn = min(tn, rows_for_depth)

    if max_rows is not None:                                      # testing knob
        tn = min(tn, max_rows)

    # Snap: either one block covering everything (block == full dim is always
    # legal) or a sublane-aligned tile with a ragged, masked last block.
    if n_rows <= sublane or tn >= n_rows:
        return n_rows
    tn = max(sublane, (tn // sublane) * sublane)
    return n_rows if tn >= n_rows else tn


def rmsnorm_kernel(x_ref, scale_ref, o_ref, *, eps: float):
    # x_ref: (TN, H), scale_ref: (1, H), o_ref: (TN, H)
    x = x_ref[...].astype(jnp.float32)                    # matches torch .float()
    ms = jnp.mean(x * x, axis=-1, keepdims=True)          # single-pass statistic
    rrms = jax.lax.rsqrt(ms + eps)                        # EUP
    normed = (x * rrms).astype(x_ref.dtype)               # matches .to(x_dtype)
    o_ref[...] = normed.astype(o_ref.dtype) * scale_ref[...].astype(o_ref.dtype)


def rmsnorm_forward(x, scale, *, eps: float = 1e-6, max_rows_per_block=None):
    """RMSNorm over the last dim of x. scale: (H,). Returns same shape as x."""
    orig_shape = x.shape
    H = orig_shape[-1]
    N = int(math.prod(orig_shape[:-1])) if len(orig_shape) > 1 else 1
    out_dtype = jnp.result_type(x.dtype, scale.dtype)     # torch promotion of (x*rrms)*scale

    if N == 0 or H == 0:                                   # empty-input guard
        return jnp.zeros(orig_shape, out_dtype)

    x2 = x.reshape(N, H)
    scale2 = scale.reshape(1, H)

    sublane = _sublane_multiple(x.dtype)
    tn = _choose_row_tile(
        N, H,
        jnp.dtype(x.dtype).itemsize, jnp.dtype(out_dtype).itemsize,
        sublane, max_rows_per_block,
    )

    grid_spec = pltpu.PrefetchScalarGridSpec(
        num_scalar_prefetch=0,
        grid=(pl.cdiv(N, tn),),                            # ragged last block, no pad/slice
        in_specs=[
            pl.BlockSpec((tn, H), lambda i: (i, 0)),       # row tile of activations
            pl.BlockSpec((1, H), lambda i: (0, 0)),        # scale, resident across grid
        ],
        out_specs=pl.BlockSpec((tn, H), lambda i: (i, 0)),
    )

    out = pl.pallas_call(
        functools.partial(rmsnorm_kernel, eps=eps),
        out_shape=jax.ShapeDtypeStruct((N, H), out_dtype),
        grid_spec=grid_spec,
        compiler_params=pltpu.CompilerParams(
            dimension_semantics=("parallel",)),            # megacore sharding on v7x
    )(x2, scale2)

    return out.reshape(orig_shape)


def reference_forward(x, scale, eps: float = 1e-6):
    """Pure-JAX reference mirroring the PyTorch RMSNorm module."""
    x_dtype = x.dtype
    xf = x.astype(jnp.float32)
    rrms = jax.lax.rsqrt(jnp.mean(xf * xf, axis=-1, keepdims=True) + eps)
    return (xf * rrms).astype(x_dtype) * scale


if __name__ == "__main__":
    key = jax.random.PRNGKey(0)
    kx, ks, kr = jax.random.split(key, 3)

    # Small demo consistent with FLUX QKNorm usage: (batch, seq, head_dim).
    B, S, H = 2, 8, 32
    x = jax.random.normal(kx, (B, S, H), jnp.float32)
    # PyTorch init is ones; use a non-trivial scale so the multiply is exercised.
    scale = 1.0 + 0.1 * jax.random.normal(ks, (H,), jnp.float32)

    out = jax.block_until_ready(rmsnorm_forward(x, scale))
    ref = reference_forward(x, scale)
    assert out.shape == x.shape
    assert out.dtype == ref.dtype
    assert jnp.allclose(out, ref, atol=1e-5, rtol=1e-5), "mismatch vs reference"

    # Exercise the ragged-grid path (N % tile != 0) with lane-dense H=128.
    x_r = jax.random.normal(kr, (2, 21, 128), jnp.float32)   # N = 42 rows
    scale_r = jnp.full((128,), 1.25, jnp.float32)
    out_r = jax.block_until_ready(
        rmsnorm_forward(x_r, scale_r, max_rows_per_block=16))  # tn=16 -> ragged tail
    ref_r = reference_forward(x_r, scale_r)
    assert jnp.allclose(out_r, ref_r, atol=1e-5, rtol=1e-5), "mismatch (ragged path)"

    print("KERNEL_OK")
</pallas_src>

<mosaic_0001>
module attributes {stable_mosaic.version = 11 : i64} {
  func.func @rmsnorm_kernel(%arg0: i32, %arg1: memref<16x32xf32, #tpu.memory_space<vmem>>, %arg2: memref<1x32xf32, #tpu.memory_space<vmem>>, %arg3: memref<16x32xf32, #tpu.memory_space<vmem>>) attributes {dimension_semantics = [#tpu.dimension_semantics<parallel>], iteration_bounds = array<i64: 1>, scalar_prefetch = 0 : i64, scratch_operands = 0 : i64, tpu.core_type = #tpu.core_type<tc>, window_params = [{transform_indices = @transform_0, window_bounds = array<i64: 16, 32>}, {pipeline_mode = #tpu.pipeline_mode<synchronous>, transform_indices = @transform_1, window_bounds = array<i64: 1, 32>}, {transform_indices = @transform_2, window_bounds = array<i64: 16, 32>}]} {
    %c0 = arith.constant 0 : index
    %c0_0 = arith.constant 0 : index
    %0 = vector.load %arg1[%c0, %c0_0] : memref<16x32xf32, #tpu.memory_space<vmem>>, vector<16x32xf32>
    %1 = arith.mulf %0, %0 : vector<16x32xf32>
    %cst = arith.constant dense<0.000000e+00> : vector<16xf32>
    %2 = vector.multi_reduction <add>, %1, %cst [1] : vector<16x32xf32> to vector<16xf32>
    %3 = vector.shape_cast %2 : vector<16xf32> to vector<16x1xf32>
    %cst_1 = arith.constant 3.200000e+01 : f32
    %4 = vector.broadcast %cst_1 : f32 to vector<16x1xf32>
    %5 = arith.divf %3, %4 : vector<16x1xf32>
    %cst_2 = arith.constant 9.99999997E-7 : f32
    %6 = vector.broadcast %cst_2 : f32 to vector<16x1xf32>
    %7 = arith.addf %5, %6 : vector<16x1xf32>
    %8 = math.rsqrt %7 : vector<16x1xf32>
    %9 = vector.broadcast %8 : vector<16x1xf32> to vector<16x32xf32>
    %10 = arith.mulf %0, %9 : vector<16x32xf32>
    %c0_3 = arith.constant 0 : index
    %c0_4 = arith.constant 0 : index
    %11 = vector.load %arg2[%c0_3, %c0_4] : memref<1x32xf32, #tpu.memory_space<vmem>>, vector<1x32xf32>
    %12 = vector.broadcast %11 : vector<1x32xf32> to vector<16x32xf32>
    %13 = arith.mulf %10, %12 : vector<16x32xf32>
    %c0_5 = arith.constant 0 : index
    %c0_6 = arith.constant 0 : index
    %14 = vector.load %arg3[%c0_5, %c0_6] : memref<16x32xf32, #tpu.memory_space<vmem>>, vector<16x32xf32>
    tpu.vector_store %arg3[%c0_5, %c0_6], %13 {strides = array<i32>} : memref<16x32xf32, #tpu.memory_space<vmem>>, vector<16x32xf32>,
    return
  }
  func.func @transform_0(%arg0: i32) -> (i32, i32) {
    %c0_i32 = arith.constant 0 : i32
    %c0_i32_0 = arith.constant 0 : i32
    return %arg0, %c0_i32 : i32, i32
  }
  func.func @transform_1(%arg0: i32) -> (i32, i32) {
    %c0_i32 = arith.constant 0 : i32
    %c0_i32_0 = arith.constant 0 : i32
    %c0_i32_1 = arith.constant 0 : i32
    return %c0_i32, %c0_i32_0 : i32, i32
  }
  func.func @transform_2(%arg0: i32) -> (i32, i32) {
    %c0_i32 = arith.constant 0 : i32
    %c0_i32_0 = arith.constant 0 : i32
    return %arg0, %c0_i32 : i32, i32
  }
}

</mosaic_0001>

<llo_original>
// kernel: tpu_custom_call.1
$region0: #{tpu_custom_call.1}
  #allocation0 [shape = 'u32[]', space=smem, size = 0x4, offset = 0x4, fixed_abs, tag = 'smem constant byte address 0x4 - core index']
  #allocation1 [shape = 'u32[144,128]{1,0:T(1,128)}', space=vmem, size = 0x12000, scoped, tag = 'internal scratch']
  %s0 = inlined_call_operand.hbm [shape: f32[16,32], index: 0, kind: input, shape index: {}]
  %s1 = inlined_call_operand.vmem [shape: f32[1,32], index: 1, kind: input, shape index: {}]
  %s2 = inlined_call_operand.hbm [shape: f32[16,32], index: 2, kind: output, shape index: {}]
  %s3 = sld [smem:[#allocation0]]
  $region22: #{tpu_custom_call.1} parent=0
    _
  %s5 = ssub.s32 1, %s3
  %s6 = scalar_select 0, %s5, %s3
  $region1: #{tpu_custom_call.1} parent=0
    #allocation2 [shape = 'u8[8192]{0}', space=vmem, size = 0x2000, scoped, tag = 'input window, operand 0, single buffered']
    #allocation3 [shape = 's32[1]{0}', space=sflag, size = 0x4, scoped, tag = 'scoped memory for tpu_custom_call.1']
    #allocation4 [shape = 's32[1]{0}', space=sflag, size = 0x4, scoped, tag = 'scoped memory for tpu_custom_call.1']
    #allocation5 [shape = 'u8[8192]{0}', space=vmem, size = 0x2000, scoped, tag = 'output window, operand 0, single buffered']
    %7 = vsyncpa [#allocation3], 0
    %8 = vsyncpa [#allocation4], 0
    // Predicated region
    $region2: #{tpu_custom_call.1} parent=1 // pred_check
      _
    $region3: #{tpu_custom_call.1} parent=1 // pred_check_branch
      %10 = sbr.rel (0) target = $region5
    $region4: #{tpu_custom_call.1} parent=1 // pred_region
      %s12 = ssub.s32 256, 256
      %13 = vsyncadd [#allocation3], %s12
      %s14 = sshll.u32 [#allocation2], 4
      %s15 = int_to_ptr.vmem [resolvable:$true] %s14
      %20 = dma.hbm_to_vmem [thread:$0]  %s0, 256, %s15, [#allocation3], 128, 128, 8
    $region5: #{tpu_custom_call.1} parent=1 // pred_fallthru
      _
    // Predicated region
    $region6: #{tpu_custom_call.1} parent=1 // pred_check
      _
    $region7: #{tpu_custom_call.1} parent=1 // pred_check_branch
      %22 = sbr.rel (0) target = $region9
    $region8: #{tpu_custom_call.1} parent=1 // pred_region
      _
    $region9: #{tpu_custom_call.1} parent=1 // pred_fallthru
      _
    // Predicated region
    $region10: #{tpu_custom_call.1} parent=1 // pred_check
      _
    $region11: #{tpu_custom_call.1} parent=1 // pred_check_branch
      %24 = sbr.rel (0) target = $region13
    $region12: #{tpu_custom_call.1} parent=1 // pred_region
      %25 = dma.done [#allocation3], 256
    $region13: #{tpu_custom_call.1} parent=1 // pred_fallthru
      _
    %v26 = vld [vmem:[#allocation2] sm:$0xff]
    %v27 = vld [vmem:[#allocation2 + $0x8] sm:$0xff]
    %v28 = vmul.f32 %v26, %v26
    %v29 = vmul.f32 %v27, %v27
    %vm30 = vcmask 261120
    %v31 = vsel %vm30, %v28, 0.0
    %32 = vadd.xlane.f32.xlu0 %v31
    %v33 = vpop.xlane.xlu0 %32
    %v34 = vsel %vm30, %v29, 0.0
    %35 = vadd.xlane.f32.xlu0 %v34
    %v36 = vpop.xlane.xlu0 %35
    %v37 = vrcp.pop 32.0
    %v38 = vmul.f32 %v33, %v37
    %v39 = vmul.f32 %v36, %v37
    %v40 = vadd.f32 %v38, 1e-06
    %v41 = vadd.f32 %v39, 1e-06
    %v42 = vrsqrt.pop %v40
    %v43 = vrsqrt.pop %v41
    %v44 = vmul.f32 %v26, %v42
    %v45 = vmul.f32 %v27, %v43
    %v46 = vld [vmem:[%s1] sm:$0x1]
    %v48 = vlaneseq
    %v49 = vshrl.u32 %v48, 7
    %v50 = vsub.s32 0, %v49
    %v51 = vrot.slane %v46, %v50
    %v53 = vmul.f32 %v44, %v51
    %v54 = vmul.f32 %v45, %v51
    %55 = vst.msk [vmem:[#allocation5] sm:$0xff] %vm30, %v53
    %56 = vst.msk [vmem:[#allocation5 + $0x8] sm:$0xff] %vm30, %v54
    // Predicated region
    $region14: #{tpu_custom_call.1} parent=1 // pred_check
      _
    $region15: #{tpu_custom_call.1} parent=1 // pred_check_branch
      %58 = sbr.rel (0) target = $region17
    $region16: #{tpu_custom_call.1} parent=1 // pred_region
      %s60 = ssub.s32 256, 256
      %61 = vsyncadd [#allocation4], %s60
      %s62 = sshll.u32 [#allocation5], 4
      %s63 = int_to_ptr.vmem [resolvable:$true] %s62
      %68 = dma.vmem_to_hbm [thread:$0]  %s63, 256, %s2, [#allocation4], 128, 128, 8
    $region17: #{tpu_custom_call.1} parent=1 // pred_fallthru
      _
    // Predicated region
    $region18: #{tpu_custom_call.1} parent=1 // pred_check
      _
    $region19: #{tpu_custom_call.1} parent=1 // pred_check_branch
      %70 = sbr.rel (0) target = $region21
    $region20: #{tpu_custom_call.1} parent=1 // pred_region
      %71 = dma.done [#allocation4], 256
    $region21: #{tpu_custom_call.1} parent=1 // pred_fallthru
      _
    %72 = vsyncpa [#allocation3], 1
    %73 = vsyncpa [#allocation4], 1

</llo_original>
